<compile_context>
chip_gen: v7x
topology: tpu7x:2x2x1
jax: 0.10.0
libtpu: 0.0.40
codegen_flags: <defaults>
</compile_context>

<pallas_src>
import functools

import jax
import jax.numpy as jnp
from jax import lax
from jax.experimental import pallas as pl
from jax.experimental.pallas import tpu as pltpu

LANES = 128        # lane width: last dim of every tile
ROW_ALIGN = 16     # sublane alignment that satisfies both f32 (8) and bf16 (16)
ACC_ROWS = 128     # rows of the resident per-core accumulator block
CHUNK_ROWS = 1024  # rows per inner-loop step: bounds in-kernel VMEM temporaries
N_CORES = 2        # leading "parallel" grid axis (v7x megacore; harmless elsewhere)


def _smooth_l1_elementwise(x, t, beta):
    """Elementwise smooth-L1 with f32 math (matches `flag.float()` in torch)."""
    flag = jnp.abs(x - t).astype(jnp.float32)
    if beta > 0.0:
        return jnp.where(flag < beta, (0.5 / beta) * flag * flag, flag - 0.5 * beta)
    return flag  # torch-style: beta == 0 degenerates to pure L1


def _smooth_l1_kernel(x_ref, t_ref, out_ref, *, beta, tm, spc, total_blocks,
                      tail_rows, clamp_exists):
    c = pl.program_id(0)
    i = pl.program_id(1)
    blk = c * spc + i

    # Zero this core's resident accumulator block on its first grid step.
    @pl.when(i == 0)
    def _():
        out_ref[...] = jnp.zeros_like(out_ref)

    def accum_rows(r0, nrows):
        # Reduce an `nrows`-row slab of the tile into the resident accumulator.
        # `nrows` is a static multiple of ROW_ALIGN, so the reshape only
        # regroups whole sublane rows (free vreg reinterpretation).
        loss = _smooth_l1_elementwise(
            x_ref[pl.ds(r0, nrows), :], t_ref[pl.ds(r0, nrows), :], beta)
        if nrows % ACC_ROWS == 0:
            out_ref[...] += loss.reshape(nrows // ACC_ROWS, ACC_ROWS, LANES
                                         ).sum(axis=0)[None]
        else:
            part = loss.reshape(nrows // ROW_ALIGN, ROW_ALIGN, LANES).sum(axis=0)
            out_ref[:, :ROW_ALIGN, :] += part.reshape(1, ROW_ALIGN, LANES)

    def chunk_loop(n_chunks):
        # Rolled loop over CHUNK_ROWS slabs keeps VMEM temporaries small even
        # for large (tm, 128) blocks.
        if n_chunks == 1:
            accum_rows(0, CHUNK_ROWS)
        elif n_chunks > 1:
            def body(k, carry):
                r0 = pl.multiple_of(k * CHUNK_ROWS, CHUNK_ROWS)
                accum_rows(r0, CHUNK_ROWS)
                return carry
            lax.fori_loop(0, n_chunks, body, None)

    def full_block():
        chunk_loop(tm // CHUNK_ROWS)

    def tail_block():
        # Last block holds `tail_rows` (< tm) valid rows.  All offsets/sizes
        # are static multiples of ROW_ALIGN, so out-of-range rows are simply
        # never read -- no masking needed anywhere.
        full_chunks = tail_rows // CHUNK_ROWS
        chunk_loop(full_chunks)
        rem = tail_rows - full_chunks * CHUNK_ROWS
        if rem:
            accum_rows(full_chunks * CHUNK_ROWS, rem)

    tail_partial = tail_rows != tm
    last = total_blocks - 1

    if total_blocks == 1:
        # Single block: no branches at all (no clamped blocks possible).
        (tail_block if tail_partial else full_block)()
    elif tail_partial:
        @pl.when(blk < last)          # unmasked fast path: full in-range blocks
        def _():
            full_block()

        @pl.when(blk == last)         # static partial tail block
        def _():
            tail_block()
    elif clamp_exists:
        @pl.when(blk < total_blocks)  # skip the clamped idle-core block
        def _():
            full_block()
    else:
        full_block()


def smooth_l1_loss(inputs, targets, *, beta=1.0, reduction="mean", tm=8192):
    """Pallas implementation of Smooth_L1_Loss.forward."""
    assert inputs.shape == targets.shape
    n_elems = inputs.size
    beta = float(beta)
    if n_elems == 0:
        return jnp.float32(0.0)

    x = inputs.reshape(-1)
    t = targets.reshape(-1)

    # Aligned prefix goes through the kernel as a lane-dense (rows, 128) slab;
    # the tiny (< 16*128 element) tail is handled with plain jnp instead of
    # padding/copying both full arrays in HBM.
    align = ROW_ALIGN * LANES
    n_main = (n_elems // align) * align

    total = jnp.zeros((), jnp.float32)

    if n_main:
        rows = n_main // LANES                                # multiple of 16

        # Row tile: as large as requested but a multiple of CHUNK_ROWS and no
        # larger than needed to cover the whole array in one block.
        tm = max(CHUNK_ROWS, (int(tm) // CHUNK_ROWS) * CHUNK_ROWS)
        tm = min(tm, pl.cdiv(rows, CHUNK_ROWS) * CHUNK_ROWS)

        total_blocks = pl.cdiv(rows, tm)
        n_cores = min(N_CORES, total_blocks)
        spc = pl.cdiv(total_blocks, n_cores)                  # grid steps / core
        clamp_exists = (n_cores * spc) != total_blocks
        tail_rows = rows - (total_blocks - 1) * tm            # rows in last block

        if clamp_exists:
            def in_map(c, i):
                # Idle-core tail blocks clamp onto the last valid block; their
                # compute is skipped inside the kernel via pl.when.
                return (jnp.minimum(c * spc + i, total_blocks - 1), 0)
        else:
            def in_map(c, i):
                return (c * spc + i, 0)

        kernel = functools.partial(
            _smooth_l1_kernel, beta=beta, tm=tm, spc=spc,
            total_blocks=total_blocks, tail_rows=tail_rows,
            clamp_exists=clamp_exists)

        itemsize = jnp.dtype(inputs.dtype).itemsize
        # 2 inputs x 2 pipeline buffers x tile + headroom for chunk temporaries.
        # Explicit so big tiles work on v5e (16 MiB scoped default) while
        # staying well under v7x's 64 MiB physical VMEM per core.
        vmem_limit = min(60 << 20,
                         max(32 << 20, 4 * tm * LANES * itemsize + (8 << 20)))

        x_main = x[:n_main].reshape(rows, LANES)
        t_main = t[:n_main].reshape(rows, LANES)

        partials = pl.pallas_call(
            kernel,
            out_shape=jax.ShapeDtypeStruct((n_cores, ACC_ROWS, LANES), jnp.float32),
            grid_spec=pltpu.PrefetchScalarGridSpec(
                num_scalar_prefetch=0,
                grid=(n_cores, spc),
                in_specs=[
                    pl.BlockSpec((tm, LANES), in_map),
                    pl.BlockSpec((tm, LANES), in_map),
                ],
                out_specs=pl.BlockSpec((1, ACC_ROWS, LANES), lambda c, i: (c, 0, 0)),
            ),
            compiler_params=pltpu.CompilerParams(
                dimension_semantics=("parallel", "arbitrary"),
                vmem_limit_bytes=int(vmem_limit),
            ),
            cost_estimate=pl.CostEstimate(
                flops=8 * n_main,
                transcendentals=0,
                bytes_accessed=2 * n_main * itemsize + n_cores * ACC_ROWS * LANES * 4,
            ),
        )(x_main, t_main)

        total = jnp.sum(partials)   # single tiny cross-lane reduce

    if n_main != n_elems:
        # Sub-2048-element unaligned tail: cheaper as one fused XLA op than
        # copying both full arrays through a pad.
        total = total + jnp.sum(_smooth_l1_elementwise(x[n_main:], t[n_main:], beta))

    if reduction == "mean":
        return total / jnp.float32(n_elems)
    return total


def _reference(inputs, targets, beta, reduction):
    flag = jnp.abs(inputs - targets).astype(jnp.float32)
    if beta > 0.0:
        loss = jnp.where(flag < beta, 0.5 / beta * flag ** 2, flag - 0.5 * beta)
    else:
        loss = flag
    return jnp.mean(loss) if reduction == "mean" else jnp.sum(loss)


if __name__ == "__main__":
    key = jax.random.PRNGKey(0)
    keys = jax.random.split(key, 8)
    beta = 1.0

    # Case 1: NCHW-style small input (lane-aligned element count).
    shape = (2, 4, 16, 16)
    x1 = jax.random.normal(keys[0], shape, dtype=jnp.float32)
    t1 = jax.random.normal(keys[1], shape, dtype=jnp.float32)
    got_mean = smooth_l1_loss(x1, t1, beta=beta, reduction="mean")
    got_sum = smooth_l1_loss(x1, t1, beta=beta, reduction="sum")
    jax.block_until_ready((got_mean, got_sum))
    assert jnp.allclose(got_mean, _reference(x1, t1, beta, "mean"), rtol=1e-5, atol=1e-5)
    assert jnp.allclose(got_sum, _reference(x1, t1, beta, "sum"), rtol=1e-5, atol=1e-4)

    # Case 2: tiny odd shape (< one aligned row group) — pure wrapper tail path.
    shape2 = (3, 5, 7, 11)
    x2 = jax.random.normal(keys[2], shape2, dtype=jnp.float32)
    t2 = jax.random.normal(keys[3], shape2, dtype=jnp.float32)
    got2 = smooth_l1_loss(x2, t2, beta=beta, reduction="mean")
    jax.block_until_ready(got2)
    assert jnp.allclose(got2, _reference(x2, t2, beta, "mean"), rtol=1e-5, atol=1e-5)

    # Case 3: unaligned 1-D input exercising multi-block grid, both cores, the
    # in-kernel chunk loop, the partial tail block, the clamped idle-core
    # block, and the wrapper tail (5344 rows + 123 leftover elements).
    n3 = 5344 * 128 + 123
    x3 = jax.random.normal(keys[4], (n3,), dtype=jnp.float32)
    t3 = jax.random.normal(keys[5], (n3,), dtype=jnp.float32)
    got3a = smooth_l1_loss(x3, t3, beta=beta, reduction="mean", tm=2048)
    got3b = smooth_l1_loss(x3, t3, beta=beta, reduction="sum")  # default tile
    jax.block_until_ready((got3a, got3b))
    assert jnp.allclose(got3a, _reference(x3, t3, beta, "mean"), rtol=1e-5, atol=1e-5)
    assert jnp.allclose(got3b, _reference(x3, t3, beta, "sum"), rtol=5e-5, atol=1e-2)

    # Case 4: bfloat16 inputs (f32 accumulation in-kernel).
    x4 = jax.random.normal(keys[6], shape, dtype=jnp.bfloat16)
    t4 = jax.random.normal(keys[7], shape, dtype=jnp.bfloat16)
    got4 = smooth_l1_loss(x4, t4, beta=beta, reduction="mean")
    jax.block_until_ready(got4)
    assert jnp.allclose(got4, _reference(x4, t4, beta, "mean"), rtol=1e-3, atol=1e-3)

    print("KERNEL_OK")
</pallas_src>

<mosaic_0001>
module attributes {stable_mosaic.version = 11 : i64} {
  func.func @_smooth_l1_kernel(%arg0: i32, %arg1: i32, %arg2: memref<1024x128xf32, #tpu.memory_space<vmem>>, %arg3: memref<1024x128xf32, #tpu.memory_space<vmem>>, %arg4: memref<1x128x128xf32, #tpu.memory_space<vmem>>) attributes {dimension_semantics = [#tpu.dimension_semantics<parallel>, #tpu.dimension_semantics<arbitrary>], iteration_bounds = array<i64: 1, 1>, scalar_prefetch = 0 : i64, scratch_operands = 0 : i64, tpu.core_type = #tpu.core_type<tc>, window_params = [{transform_indices = @transform_0, window_bounds = array<i64: 1024, 128>}, {transform_indices = @transform_1, window_bounds = array<i64: 1024, 128>}, {transform_indices = @transform_2, window_bounds = array<i64: 1, 128, 128>}]} {
    %c0_i32 = arith.constant 0 : i32
    %0 = arith.cmpi eq, %arg1, %c0_i32 : i32
    %1 = arith.extui %0 : i1 to i32
    %c0_i32_0 = arith.constant 0 : i32
    %2 = arith.cmpi ne, %1, %c0_i32_0 : i32
    scf.if %2 {
      %cst_13 = arith.constant 0.000000e+00 : f32
      %21 = vector.broadcast %cst_13 : f32 to vector<1x128x128xf32>
      %c0_14 = arith.constant 0 : index
      %c0_15 = arith.constant 0 : index
      %c0_16 = arith.constant 0 : index
      %22 = vector.load %arg4[%c0_14, %c0_15, %c0_16] : memref<1x128x128xf32, #tpu.memory_space<vmem>>, vector<1x128x128xf32>
      tpu.vector_store %arg4[%c0_14, %c0_15, %c0_16], %21 {strides = array<i32>} : memref<1x128x128xf32, #tpu.memory_space<vmem>>, vector<1x128x128xf32>,
    } else {
    }
    %c0 = arith.constant 0 : index
    %c0_1 = arith.constant 0 : index
    %3 = vector.load %arg2[%c0, %c0_1] : memref<1024x128xf32, #tpu.memory_space<vmem>>, vector<16x128xf32>
    %c0_2 = arith.constant 0 : index
    %c0_3 = arith.constant 0 : index
    %4 = vector.load %arg3[%c0_2, %c0_3] : memref<1024x128xf32, #tpu.memory_space<vmem>>, vector<16x128xf32>
    %5 = arith.subf %3, %4 : vector<16x128xf32>
    %6 = math.absf %5 : vector<16x128xf32>
    %cst = arith.constant 1.000000e+00 : f32
    %7 = vector.broadcast %cst : f32 to vector<16x128xf32>
    %8 = arith.cmpf olt, %6, %7 : vector<16x128xf32>
    %cst_4 = arith.constant 5.000000e-01 : f32
    %9 = vector.broadcast %cst_4 : f32 to vector<16x128xf32>
    %10 = arith.mulf %9, %6 : vector<16x128xf32>
    %11 = arith.mulf %10, %6 : vector<16x128xf32>
    %cst_5 = arith.constant 5.000000e-01 : f32
    %12 = vector.broadcast %cst_5 : f32 to vector<16x128xf32>
    %13 = arith.subf %6, %12 : vector<16x128xf32>
    %14 = arith.select %8, %11, %13 : vector<16x128xi1>, vector<16x128xf32>
    %15 = vector.shape_cast %14 : vector<16x128xf32> to vector<1x16x128xf32>
    %cst_6 = arith.constant dense<0.000000e+00> : vector<16x128xf32>
    %16 = vector.multi_reduction <add>, %15, %cst_6 [0] : vector<1x16x128xf32> to vector<16x128xf32>
    %c0_7 = arith.constant 0 : index
    %c0_8 = arith.constant 0 : index
    %c0_9 = arith.constant 0 : index
    %17 = vector.load %arg4[%c0_7, %c0_8, %c0_9] : memref<1x128x128xf32, #tpu.memory_space<vmem>>, vector<1x16x128xf32>
    %18 = vector.shape_cast %16 : vector<16x128xf32> to vector<1x16x128xf32>
    %19 = arith.addf %17, %18 : vector<1x16x128xf32>
    %c0_10 = arith.constant 0 : index
    %c0_11 = arith.constant 0 : index
    %c0_12 = arith.constant 0 : index
    %20 = vector.load %arg4[%c0_10, %c0_11, %c0_12] : memref<1x128x128xf32, #tpu.memory_space<vmem>>, vector<1x16x128xf32>
    tpu.vector_store %arg4[%c0_10, %c0_11, %c0_12], %19 {strides = array<i32>} : memref<1x128x128xf32, #tpu.memory_space<vmem>>, vector<1x16x128xf32>,
    return
  }
  func.func @transform_0(%arg0: i32, %arg1: i32) -> (i32, i32) {
    %c1_i32 = arith.constant 1 : i32
    %0 = arith.muli %arg0, %c1_i32 : i32
    %1 = arith.addi %0, %arg1 : i32
    %c0_i32 = arith.constant 0 : i32
    %c0_i32_0 = arith.constant 0 : i32
    return %1, %c0_i32 : i32, i32
  }
  func.func @transform_1(%arg0: i32, %arg1: i32) -> (i32, i32) {
    %c1_i32 = arith.constant 1 : i32
    %0 = arith.muli %arg0, %c1_i32 : i32
    %1 = arith.addi %0, %arg1 : i32
    %c0_i32 = arith.constant 0 : i32
    %c0_i32_0 = arith.constant 0 : i32
    return %1, %c0_i32 : i32, i32
  }
  func.func @transform_2(%arg0: i32, %arg1: i32) -> (i32, i32, i32) {
    %c0_i32 = arith.constant 0 : i32
    %c0_i32_0 = arith.constant 0 : i32
    %c0_i32_1 = arith.constant 0 : i32
    return %arg0, %c0_i32, %c0_i32_0 : i32, i32, i32
  }
}

</mosaic_0001>

<llo_original>
// kernel: tpu_custom_call.1
$region0: #{tpu_custom_call.1}
  #allocation0 [shape = 'u32[]', space=smem, size = 0x4, offset = 0x4, fixed_abs, tag = 'smem constant byte address 0x4 - core index']
  #allocation1 [shape = 'u32[144,128]{1,0:T(1,128)}', space=vmem, size = 0x12000, scoped, tag = 'internal scratch']
  %s0 = inlined_call_operand.hbm [shape: f32[16,128], index: 0, kind: input, shape index: {}]
  %s1 = inlined_call_operand.hbm [shape: f32[16,128], index: 1, kind: input, shape index: {}]
  %s2 = inlined_call_operand.hbm [shape: f32[1,128,128], index: 2, kind: output, shape index: {}]
  %s3 = sld [smem:[#allocation0]]
  $region30: #{tpu_custom_call.1} parent=0
    _
  %s5 = ssub.s32 1, %s3
  %s6 = scalar_select 0, %s5, %s3
  $region1: #{tpu_custom_call.1} parent=0
    #allocation2 [shape = 'u8[524288]{0}', space=vmem, size = 0x80000, scoped, tag = 'input window, operand 0, single buffered']
    #allocation3 [shape = 's32[1]{0}', space=sflag, size = 0x4, scoped, tag = 'scoped memory for tpu_custom_call.1']
    #allocation4 [shape = 's32[1]{0}', space=sflag, size = 0x4, scoped, tag = 'scoped memory for tpu_custom_call.1']
    #allocation5 [shape = 'u8[524288]{0}', space=vmem, size = 0x80000, scoped, tag = 'input window, operand 1, single buffered']
    #allocation6 [shape = 's32[1]{0}', space=sflag, size = 0x4, scoped, tag = 'scoped memory for tpu_custom_call.1']
    #allocation7 [shape = 'u8[65536]{0}', space=vmem, size = 0x10000, scoped, tag = 'output window, operand 0, single buffered']
    %7 = vsyncpa [#allocation3], 0
    %8 = vsyncpa [#allocation6], 0
    %9 = vsyncpa [#allocation4], 0
    // Predicated region
    $region2: #{tpu_custom_call.1} parent=1 // pred_check
      _
    $region3: #{tpu_custom_call.1} parent=1 // pred_check_branch
      %11 = sbr.rel (0) target = $region5
    $region4: #{tpu_custom_call.1} parent=1 // pred_region
      %s12 = sadd.s32 0, 0
      %s13 = smul.u32 128, %s12
      %s14 = ssub.s32 2, %s13
      %s15 = smul.u32 128, %s14
      %s17 = ssub.s32 16384, %s15
      %18 = vsyncadd [#allocation3], %s17
      %p19 = scmp.ne.s32.totalorder 0, %s15
      %s20 = smul.addr %s13, 128
      %s21 = scalar_lea.hbm %s0, %s20
      %s22 = smul.u32 8, %s14
      %s23 = sshll.u32 [#allocation2], 4
      %s24 = int_to_ptr.vmem [resolvable:$true] %s23
      %s25 = sshll.u32 %s22, 4
      %29 = dma.hbm_to_vmem [thread:$0]  (%p19), %s21, %s25, %s24, [#allocation3], 128, 128, 8
    $region5: #{tpu_custom_call.1} parent=1 // pred_fallthru
      _
    // Predicated region
    $region6: #{tpu_custom_call.1} parent=1 // pred_check
      _
    $region7: #{tpu_custom_call.1} parent=1 // pred_check_branch
      %31 = sbr.rel (0) target = $region9
    $region8: #{tpu_custom_call.1} parent=1 // pred_region
      %s32 = sadd.s32 0, 0
      %s33 = smul.u32 128, %s32
      %s34 = ssub.s32 2, %s33
      %s35 = smul.u32 128, %s34
      %s37 = ssub.s32 16384, %s35
      %38 = vsyncadd [#allocation6], %s37
      %p39 = scmp.ne.s32.totalorder 0, %s35
      %s40 = smul.addr %s33, 128
      %s41 = scalar_lea.hbm %s1, %s40
      %s42 = smul.u32 8, %s34
      %s43 = sshll.u32 [#allocation5], 4
      %s44 = int_to_ptr.vmem [resolvable:$true] %s43
      %s45 = sshll.u32 %s42, 4
      %49 = dma.hbm_to_vmem [thread:$0]  (%p39), %s41, %s45, %s44, [#allocation6], 128, 128, 8
    $region9: #{tpu_custom_call.1} parent=1 // pred_fallthru
      _
    // Predicated region
    $region10: #{tpu_custom_call.1} parent=1 // pred_check
      _
    $region11: #{tpu_custom_call.1} parent=1 // pred_check_branch
      %51 = sbr.rel (0) target = $region13
    $region12: #{tpu_custom_call.1} parent=1 // pred_region
      %52 = dma.done [#allocation3], 16384
    $region13: #{tpu_custom_call.1} parent=1 // pred_fallthru
      _
    // Predicated region
    $region14: #{tpu_custom_call.1} parent=1 // pred_check
      _
    $region15: #{tpu_custom_call.1} parent=1 // pred_check_branch
      %54 = sbr.rel (0) target = $region17
    $region16: #{tpu_custom_call.1} parent=1 // pred_region
      %55 = dma.done [#allocation6], 16384
    $region17: #{tpu_custom_call.1} parent=1 // pred_fallthru
      _
    %s56 = sadd.s32 0, 0
    %s57 = smul.u32 128, %s56
    %s58 = ssub.s32 2, %s57
    %s59 = smul.u32 128, %s58
    %s60 = sadd.s32 0, 0
    %s61 = smul.u32 128, %s60
    %s62 = ssub.s32 2, %s61
    %s63 = smul.u32 128, %s62
    %p64 = scmp.eq.s32.totalorder 0, 0
    // Predicated region
    $region18: #{tpu_custom_call.1} parent=1 // pred_check
      %p65 = pneg %p64
    $region19: #{tpu_custom_call.1} parent=1 // pred_check_branch
      %67 = sbr.rel (%p65) target = $region21
    $region20: #{tpu_custom_call.1} parent=1 // pred_region
      %68 = vst [vmem:[#allocation7] sm:$0xff] 0.0
      %69 = vst [vmem:[#allocation7 + $0x8] sm:$0xff] 0.0
      %70 = vst [vmem:[#allocation7 + $0x10] sm:$0xff] 0.0
      %71 = vst [vmem:[#allocation7 + $0x18] sm:$0xff] 0.0
      %72 = vst [vmem:[#allocation7 + $0x20] sm:$0xff] 0.0
      %73 = vst [vmem:[#allocation7 + $0x28] sm:$0xff] 0.0
      %74 = vst [vmem:[#allocation7 + $0x30] sm:$0xff] 0.0
      %75 = vst [vmem:[#allocation7 + $0x38] sm:$0xff] 0.0
      %76 = vst [vmem:[#allocation7 + $0x40] sm:$0xff] 0.0
      %77 = vst [vmem:[#allocation7 + $0x48] sm:$0xff] 0.0
      %78 = vst [vmem:[#allocation7 + $0x50] sm:$0xff] 0.0
      %79 = vst [vmem:[#allocation7 + $0x58] sm:$0xff] 0.0
      %80 = vst [vmem:[#allocation7 + $0x60] sm:$0xff] 0.0
      %81 = vst [vmem:[#allocation7 + $0x68] sm:$0xff] 0.0
      %82 = vst [vmem:[#allocation7 + $0x70] sm:$0xff] 0.0
      %83 = vst [vmem:[#allocation7 + $0x78] sm:$0xff] 0.0
    $region21: #{tpu_custom_call.1} parent=1 // pred_fallthru
      _
    %v84 = vld [vmem:[#allocation2] sm:$0xff]
    %v85 = vld [vmem:[#allocation2 + $0x8] sm:$0xff]
    %v86 = vld [vmem:[#allocation5] sm:$0xff]
    %v87 = vld [vmem:[#allocation5 + $0x8] sm:$0xff]
    %v88 = vsub.f32 %v84, %v86
    %v89 = vsub.f32 %v85, %v87
    %v90 = vand.u32 2147483647, %v88
    %v91 = vand.u32 2147483647, %v89
    %vm92 = vcmp.lt.f32.partialorder %v90, 1.0
    %vm93 = vcmp.lt.f32.partialorder %v91, 1.0
    %v94 = vmul.f32 %v90, 0.5
    %v95 = vmul.f32 %v91, 0.5
    %v96 = vmul.f32 %v94, %v90
    %v97 = vmul.f32 %v95, %v91
    %v98 = vsub.f32 %v90, 0.5
    %v99 = vsub.f32 %v91, 0.5
    %v100 = vsel %vm92, %v96, %v98
    %v101 = vsel %vm93, %v97, %v99
    %v102 = vadd.f32 %v100, 0.0
    %v103 = vadd.f32 %v101, 0.0
    %v104 = vld [vmem:[#allocation7] sm:$0xff]
    %v105 = vld [vmem:[#allocation7 + $0x8] sm:$0xff]
    %v106 = vadd.f32 %v104, %v102
    %v107 = vadd.f32 %v105, %v103
    %108 = vst [vmem:[#allocation7] sm:$0xff] %v106
    %109 = vst [vmem:[#allocation7 + $0x8] sm:$0xff] %v107
    // Predicated region
    $region22: #{tpu_custom_call.1} parent=1 // pred_check
      _
    $region23: #{tpu_custom_call.1} parent=1 // pred_check_branch
      %111 = sbr.rel (0) target = $region25
    $region24: #{tpu_custom_call.1} parent=1 // pred_region
      %s113 = ssub.s32 2048, 2048
      %114 = vsyncadd [#allocation4], %s113
      %s115 = sshll.u32 [#allocation7], 4
      %s116 = int_to_ptr.vmem [resolvable:$true] %s115
      %121 = dma.vmem_to_hbm [thread:$0]  %s116, 2048, %s2, [#allocation4], 128, 128, 8
    $region25: #{tpu_custom_call.1} parent=1 // pred_fallthru
      _
    // Predicated region
    $region26: #{tpu_custom_call.1} parent=1 // pred_check
      _
    $region27: #{tpu_custom_call.1} parent=1 // pred_check_branch
      %123 = sbr.rel (0) target = $region29
    $region28: #{tpu_custom_call.1} parent=1 // pred_region
      %124 = dma.done [#allocation4], 2048
    $region29: #{tpu_custom_call.1} parent=1 // pred_fallthru
      _
    %125 = vsyncpa [#allocation3], 1
    %126 = vsyncpa [#allocation6], 1
    %127 = vsyncpa [#allocation4], 1

</llo_original>
